<compile_context>
chip_gen: v7x
topology: tpu7x:2x2x1
jax: 0.10.0
libtpu: 0.0.40
codegen_flags: <defaults>
</compile_context>

<pallas_src>
import functools
import math

import jax
import jax.numpy as jnp
from jax.experimental import pallas as pl
from jax.experimental.pallas import tpu as pltpu


# ----------------------------- in-kernel helpers -----------------------------

def _layer_norm(x, g, b, eps=1e-12):
    # torch.nn.LayerNorm over last dim, biased variance, eps=1e-12; stats in f32.
    x = x.astype(jnp.float32)
    mu = jnp.mean(x, axis=-1, keepdims=True)
    var = jnp.mean(jnp.square(x - mu), axis=-1, keepdims=True)
    return (x - mu) * jax.lax.rsqrt(var + eps) * g + b


def _gelu_exact(x):
    # F.gelu: exact erf-based GELU (in f32)
    return x * 0.5 * (1.0 + jax.lax.erf(x * (1.0 / math.sqrt(2.0))))


# ----------------------------- tiling / compiler helpers ----------------------

def _pick_row_tile(n_rows, max_tile=256):
    """Largest row tile <= max_tile that is a multiple of 8 and divides n_rows.
    Prefers tiles leaving >= 2 grid steps (v7x megacore + pipelining slack)."""
    cands = [t for t in range(8, min(max_tile, n_rows) + 1, 8) if n_rows % t == 0]
    if not cands:
        return n_rows                      # single full-extent block (always legal)
    multi = [t for t in cands if n_rows // t >= 2]
    return max(multi) if multi else max(cands)


def _block_bytes(*shape_dtypes):
    total = 0
    for shape, dtype in shape_dtypes:
        total += math.prod(shape) * jnp.dtype(dtype).itemsize
    return total


def _compiler_params(n_grid_axes, block_bytes):
    # explicit scoped-VMEM request: double-buffered blocks + headroom, kept well
    # below v7x's 64 MiB physical VMEM (and the 16/32 MiB scoped defaults).
    limit = int(min(48 * 2**20, max(8 * 2**20, 2 * block_bytes + 2 * 2**20)))
    return pltpu.CompilerParams(
        dimension_semantics=("parallel",) * n_grid_axes,
        vmem_limit_bytes=limit,
    )


# ----------------------------- Pallas kernels --------------------------------

def embeddings_kernel(we_ref, pe_ref, te_ref, g_ref, b_ref, out_ref):
    # row tiles of the (B*S, H) embedding sum + LayerNorm
    s = we_ref[...] + pe_ref[...] + te_ref[...]
    out_ref[...] = _layer_norm(s, g_ref[...], b_ref[...]).astype(out_ref.dtype)


def qkv_proj_kernel(x_ref, w_ref, b_ref, out_ref):
    # fused Q/K/V projection: (tile_m, H) @ (H, 3H) + b   (bf16 MXU, f32 accumulate)
    y = jnp.dot(x_ref[...].astype(jnp.bfloat16), w_ref[...],
                preferred_element_type=jnp.float32) + b_ref[...]
    out_ref[...] = y.astype(out_ref.dtype)


def attention_kernel(q_ref, k_ref, v_ref, bias_ref, out_ref, *, scale):
    # head-batched attention for one batch element: blocks are (1, nh, S, hd)
    q = q_ref[0]                      # (nh, S, hd) bf16
    k = k_ref[0]
    v = v_ref[0]
    s = jnp.einsum("hqd,hkd->hqk", q, k,
                   preferred_element_type=jnp.float32) * scale     # f32 scores
    s = s + bias_ref[...]             # (1, 1, S) additive -10000 mask, f32
    s = s - jnp.max(s, axis=-1, keepdims=True)
    p = jnp.exp(s)
    p = p * pl.reciprocal(jnp.sum(p, axis=-1, keepdims=True), approx=True)
    ctx = jnp.einsum("hqk,hkd->hqd", p.astype(v.dtype), v,
                     preferred_element_type=jnp.float32)
    out_ref[0] = ctx.astype(out_ref.dtype)


def attn_out_ln_kernel(ctx_ref, res_ref, w_ref, b_ref, g_ref, beta_ref, out_ref):
    # attention output projection + residual + LayerNorm, on (tile_m, H) rows
    proj = jnp.dot(ctx_ref[...], w_ref[...],
                   preferred_element_type=jnp.float32) + b_ref[...]
    out_ref[...] = _layer_norm(proj + res_ref[...], g_ref[...],
                               beta_ref[...]).astype(out_ref.dtype)


def ffn_ln_kernel(x_ref, wi_ref, bi_ref, wo_ref, bo_ref, g_ref, beta_ref, out_ref):
    # GELU MLP + residual + LayerNorm, on (tile_m, H) rows
    x = x_ref[...]                                            # f32 residual stream
    h = jnp.dot(x.astype(jnp.bfloat16), wi_ref[...],
                preferred_element_type=jnp.float32) + bi_ref[...]
    h = _gelu_exact(h).astype(jnp.bfloat16)
    y = jnp.dot(h, wo_ref[...], preferred_element_type=jnp.float32) + bo_ref[...]
    out_ref[...] = _layer_norm(y + x, g_ref[...], beta_ref[...]).astype(out_ref.dtype)


def pooler_kernel(x_ref, w_ref, b_ref, out_ref):
    # tanh(b + x @ W)
    y = jnp.dot(x_ref[...].astype(jnp.bfloat16), w_ref[...],
                preferred_element_type=jnp.float32) + b_ref[...]
    out_ref[...] = jnp.tanh(y).astype(out_ref.dtype)


# ----------------------------- wrappers ---------------------------------------

def run_embeddings(we, pe, te, gamma, beta):
    R, H = we.shape
    tile = _pick_row_tile(R)
    row = lambda i: (i, 0)
    const = lambda i: (0, 0)
    bb = _block_bytes(((tile, H), jnp.float32)) * 4 + _block_bytes(((1, H), jnp.float32)) * 2
    return pl.pallas_call(
        embeddings_kernel,
        out_shape=jax.ShapeDtypeStruct((R, H), jnp.float32),
        grid=(R // tile,),
        in_specs=[
            pl.BlockSpec((tile, H), row),
            pl.BlockSpec((tile, H), row),
            pl.BlockSpec((tile, H), row),
            pl.BlockSpec((1, H), const),
            pl.BlockSpec((1, H), const),
        ],
        out_specs=pl.BlockSpec((tile, H), row),
        compiler_params=_compiler_params(1, bb),
    )(we, pe, te, gamma, beta)


def run_qkv_proj(x2d, w, b):
    R, H = x2d.shape
    H3 = w.shape[1]
    tile = _pick_row_tile(R)
    bb = _block_bytes(((tile, H), x2d.dtype), ((H, H3), w.dtype),
                      ((1, H3), b.dtype), ((tile, H3), jnp.bfloat16))
    return pl.pallas_call(
        qkv_proj_kernel,
        out_shape=jax.ShapeDtypeStruct((R, H3), jnp.bfloat16),
        grid=(R // tile,),
        in_specs=[
            pl.BlockSpec((tile, H), lambda i: (i, 0)),
            # grid-invariant weights: constant index map -> fetched once / kept resident
            pl.BlockSpec((H, H3), lambda i: (0, 0)),
            pl.BlockSpec((1, H3), lambda i: (0, 0)),
        ],
        out_specs=pl.BlockSpec((tile, H3), lambda i: (i, 0)),
        compiler_params=_compiler_params(1, bb),
    )(x2d, w, b)


def run_attention(q, k, v, bias, scale):
    B, NH, S, HD = q.shape
    kernel = functools.partial(attention_kernel, scale=scale)
    bb = (_block_bytes(((1, NH, S, HD), q.dtype)) * 4
          + _block_bytes(((1, 1, S), bias.dtype))
          + _block_bytes(((NH, S, S), jnp.float32)) * 2)     # score temporaries
    return pl.pallas_call(
        kernel,
        out_shape=jax.ShapeDtypeStruct((B, NH, S, HD), jnp.bfloat16),
        grid=(B,),
        in_specs=[
            pl.BlockSpec((1, NH, S, HD), lambda b: (b, 0, 0, 0)),
            pl.BlockSpec((1, NH, S, HD), lambda b: (b, 0, 0, 0)),
            pl.BlockSpec((1, NH, S, HD), lambda b: (b, 0, 0, 0)),
            pl.BlockSpec((1, 1, S), lambda b: (b, 0, 0)),
        ],
        out_specs=pl.BlockSpec((1, NH, S, HD), lambda b: (b, 0, 0, 0)),
        compiler_params=_compiler_params(1, bb),
    )(q, k, v, bias)


def run_attn_out_ln(ctx2d, res2d, w, b, g, beta):
    R, H = ctx2d.shape
    tile = _pick_row_tile(R)
    row = lambda i: (i, 0)
    const = lambda i: (0, 0)
    bb = _block_bytes(((tile, H), ctx2d.dtype), ((tile, H), res2d.dtype),
                      ((H, H), w.dtype), ((1, H), b.dtype), ((1, H), g.dtype),
                      ((1, H), beta.dtype), ((tile, H), jnp.float32))
    return pl.pallas_call(
        attn_out_ln_kernel,
        out_shape=jax.ShapeDtypeStruct((R, H), jnp.float32),
        grid=(R // tile,),
        in_specs=[
            pl.BlockSpec((tile, H), row),
            pl.BlockSpec((tile, H), row),
            pl.BlockSpec((H, H), const),
            pl.BlockSpec((1, H), const),
            pl.BlockSpec((1, H), const),
            pl.BlockSpec((1, H), const),
        ],
        out_specs=pl.BlockSpec((tile, H), row),
        compiler_params=_compiler_params(1, bb),
    )(ctx2d, res2d, w, b, g, beta)


def run_ffn_ln(x2d, wi, bi, wo, bo, g, beta):
    R, H = x2d.shape
    I = wi.shape[1]
    tile = _pick_row_tile(R)
    row = lambda i: (i, 0)
    const = lambda i: (0, 0)
    bb = _block_bytes(((tile, H), x2d.dtype), ((H, I), wi.dtype), ((1, I), bi.dtype),
                      ((I, H), wo.dtype), ((1, H), bo.dtype), ((1, H), g.dtype),
                      ((1, H), beta.dtype), ((tile, H), jnp.float32),
                      ((tile, I), jnp.float32))
    return pl.pallas_call(
        ffn_ln_kernel,
        out_shape=jax.ShapeDtypeStruct((R, H), jnp.float32),
        grid=(R // tile,),
        in_specs=[
            pl.BlockSpec((tile, H), row),
            pl.BlockSpec((H, I), const),
            pl.BlockSpec((1, I), const),
            pl.BlockSpec((I, H), const),
            pl.BlockSpec((1, H), const),
            pl.BlockSpec((1, H), const),
            pl.BlockSpec((1, H), const),
        ],
        out_specs=pl.BlockSpec((tile, H), row),
        compiler_params=_compiler_params(1, bb),
    )(x2d, wi, bi, wo, bo, g, beta)


def run_pooler(first_tok, w, b):
    B, H = first_tok.shape
    Bp = max(8, ((B + 7) // 8) * 8)     # pad rows to sublane multiple -> unmasked stores
    x = jnp.zeros((Bp, H), first_tok.dtype).at[:B].set(first_tok)
    out = pl.pallas_call(
        pooler_kernel,
        out_shape=jax.ShapeDtypeStruct((Bp, H), first_tok.dtype),
    )(x, w, b)
    return out[:B]


# ----------------------------- transformer layer -------------------------------

def run_bert_layer(x, attn_bias, p, num_heads):
    B, S, H = x.shape
    hd = H // num_heads
    R = B * S
    x2d = x.reshape(R, H)

    # fused QKV projection on B*S rows (full MXU contraction width)
    qkv = run_qkv_proj(x2d, p["wqkv"], p["bqkv"])                      # (R, 3H) bf16
    qkv = qkv.reshape(B, S, 3, num_heads, hd)
    q = jnp.transpose(qkv[:, :, 0], (0, 2, 1, 3))                      # (B, nh, S, hd)
    k = jnp.transpose(qkv[:, :, 1], (0, 2, 1, 3))
    v = jnp.transpose(qkv[:, :, 2], (0, 2, 1, 3))

    ctx = run_attention(q, k, v, attn_bias, 1.0 / math.sqrt(hd))       # (B, nh, S, hd)
    ctx2d = jnp.transpose(ctx, (0, 2, 1, 3)).reshape(R, H)             # head merge (glue)

    x1 = run_attn_out_ln(ctx2d, x2d, p["wo"], p["bo"], p["ln1_g"], p["ln1_b"])
    x2 = run_ffn_ln(x1, p["wi"], p["bi"], p["wo2"], p["bo2"], p["ln2_g"], p["ln2_b"])
    return x2.reshape(B, S, H)


# ----------------------------- full model -------------------------------------

def bert_forward(input_ids, token_type_ids, attention_mask, params, num_heads):
    B, S = input_ids.shape
    H = params["word_emb"].shape[1]

    # embedding gathers (plain-JAX glue)
    # TODO(synk): fuse the gathers into the embeddings kernel (PrefetchScalarGridSpec +
    #             pl.Element row gather) for large vocab/seq — pure HBM-bandwidth win.
    we = params["word_emb"][input_ids].reshape(B * S, H)
    pe = jnp.broadcast_to(params["pos_emb"][jnp.arange(S, dtype=jnp.int32)],
                          (B, S, H)).reshape(B * S, H)
    te = params["type_emb"][token_type_ids].reshape(B * S, H)

    x = run_embeddings(we, pe, te, params["emb_ln_g"],
                       params["emb_ln_b"]).reshape(B, S, H)

    # additive attention bias (PyTorch BERT: (1 - mask) * -10000), computed once, f32
    attn_bias = ((1.0 - attention_mask.astype(jnp.float32)) * -10000.0).reshape(B, 1, S)

    for layer_params in params["layers"]:
        x = run_bert_layer(x, attn_bias, layer_params, num_heads)

    pooled = run_pooler(x[:, 0, :], params["pool_w"], params["pool_b"])
    # output_all_encoded_layers=False -> encoded_layers = [last layer]
    return [x], pooled


# ----------------------------- parameter init ---------------------------------

def init_params(key, vocab_size, max_pos, type_vocab, H, I, num_layers, std=0.02):
    keys = iter(jax.random.split(key, 8 + num_layers * 8))
    nrm = lambda k, shape, dt=jnp.float32: (
        jax.random.normal(k, shape, jnp.float32) * std).astype(dt)
    zeros = lambda n: jnp.zeros((1, n), jnp.float32)
    ones = lambda n: jnp.ones((1, n), jnp.float32)

    params = {
        "word_emb": nrm(next(keys), (vocab_size, H)),
        "pos_emb": nrm(next(keys), (max_pos, H)),
        "type_emb": nrm(next(keys), (type_vocab, H)),
        "emb_ln_g": ones(H), "emb_ln_b": zeros(H),
        "pool_w": nrm(next(keys), (H, H), jnp.bfloat16),
        "pool_b": zeros(H),
        "layers": [],
    }
    for _ in range(num_layers):
        layer = {
            # fused [Wq | Wk | Wv] columns; per-head columns contiguous (same split as
            # PyTorch's q.view(B, S, nh, hd).permute(0, 2, 1, 3))
            "wqkv": nrm(next(keys), (H, 3 * H), jnp.bfloat16), "bqkv": zeros(3 * H),
            "wo": nrm(next(keys), (H, H), jnp.bfloat16), "bo": zeros(H),
            "ln1_g": ones(H), "ln1_b": zeros(H),
            "wi": nrm(next(keys), (H, I), jnp.bfloat16), "bi": zeros(I),
            "wo2": nrm(next(keys), (I, H), jnp.bfloat16), "bo2": zeros(H),
            "ln2_g": ones(H), "ln2_b": zeros(H),
        }
        params["layers"].append(layer)
    return params


# ----------------------------- main --------------------------------------------

if __name__ == "__main__":
    # small BERT config
    B, S = 2, 16
    H, I = 128, 256
    NUM_HEADS = 4
    NUM_LAYERS = 2
    VOCAB, MAX_POS, TYPE_VOCAB = 512, 64, 2

    key = jax.random.PRNGKey(0)
    k_ids, k_tt, k_params = jax.random.split(key, 3)

    input_ids = jax.random.randint(k_ids, (B, S), 0, VOCAB, dtype=jnp.int32)
    token_type_ids = jax.random.randint(k_tt, (B, S), 0, TYPE_VOCAB, dtype=jnp.int32)
    # attention mask: batch 0 fully valid, batch 1 has 4 padded positions
    attention_mask = jnp.ones((B, S), jnp.float32)
    attention_mask = attention_mask.at[1, S - 4:].set(0.0)

    params = init_params(k_params, VOCAB, MAX_POS, TYPE_VOCAB, H, I, NUM_LAYERS)

    encoded_layers, pooled = bert_forward(
        input_ids, token_type_ids, attention_mask, params, NUM_HEADS)

    jax.block_until_ready(encoded_layers[-1])
    jax.block_until_ready(pooled)

    assert encoded_layers[-1].shape == (B, S, H)
    assert pooled.shape == (B, H)
    assert bool(jnp.all(jnp.isfinite(encoded_layers[-1])))
    assert bool(jnp.all(jnp.isfinite(pooled)))
    print("KERNEL_OK")
</pallas_src>

<mosaic_0001>
module attributes {stable_mosaic.version = 11 : i64} {
  func.func @embeddings_kernel(%arg0: i32, %arg1: memref<16x128xf32, #tpu.memory_space<vmem>>, %arg2: memref<16x128xf32, #tpu.memory_space<vmem>>, %arg3: memref<16x128xf32, #tpu.memory_space<vmem>>, %arg4: memref<1x128xf32, #tpu.memory_space<vmem>>, %arg5: memref<1x128xf32, #tpu.memory_space<vmem>>, %arg6: memref<16x128xf32, #tpu.memory_space<vmem>>) attributes {dimension_semantics = [#tpu.dimension_semantics<parallel>], iteration_bounds = array<i64: 2>, scalar_prefetch = 0 : i64, scratch_operands = 0 : i64, tpu.core_type = #tpu.core_type<tc>, window_params = [{transform_indices = @transform_0, window_bounds = array<i64: 16, 128>}, {transform_indices = @transform_1, window_bounds = array<i64: 16, 128>}, {transform_indices = @transform_2, window_bounds = array<i64: 16, 128>}, {pipeline_mode = #tpu.pipeline_mode<synchronous>, transform_indices = @transform_3, window_bounds = array<i64: 1, 128>}, {pipeline_mode = #tpu.pipeline_mode<synchronous>, transform_indices = @transform_4, window_bounds = array<i64: 1, 128>}, {transform_indices = @transform_5, window_bounds = array<i64: 16, 128>}]} {
    %c0 = arith.constant 0 : index
    %c0_0 = arith.constant 0 : index
    %0 = vector.load %arg1[%c0, %c0_0] : memref<16x128xf32, #tpu.memory_space<vmem>>, vector<16x128xf32>
    %c0_1 = arith.constant 0 : index
    %c0_2 = arith.constant 0 : index
    %1 = vector.load %arg2[%c0_1, %c0_2] : memref<16x128xf32, #tpu.memory_space<vmem>>, vector<16x128xf32>
    %2 = arith.addf %0, %1 : vector<16x128xf32>
    %c0_3 = arith.constant 0 : index
    %c0_4 = arith.constant 0 : index
    %3 = vector.load %arg3[%c0_3, %c0_4] : memref<16x128xf32, #tpu.memory_space<vmem>>, vector<16x128xf32>
    %4 = arith.addf %2, %3 : vector<16x128xf32>
    %c0_5 = arith.constant 0 : index
    %c0_6 = arith.constant 0 : index
    %5 = vector.load %arg4[%c0_5, %c0_6] : memref<1x128xf32, #tpu.memory_space<vmem>>, vector<1x128xf32>
    %c0_7 = arith.constant 0 : index
    %c0_8 = arith.constant 0 : index
    %6 = vector.load %arg5[%c0_7, %c0_8] : memref<1x128xf32, #tpu.memory_space<vmem>>, vector<1x128xf32>
    %cst = arith.constant dense<0.000000e+00> : vector<16xf32>
    %7 = vector.multi_reduction <add>, %4, %cst [1] : vector<16x128xf32> to vector<16xf32>
    %8 = vector.shape_cast %7 : vector<16xf32> to vector<16x1xf32>
    %cst_9 = arith.constant 1.280000e+02 : f32
    %9 = vector.broadcast %cst_9 : f32 to vector<16x1xf32>
    %10 = arith.divf %8, %9 : vector<16x1xf32>
    %11 = vector.broadcast %10 : vector<16x1xf32> to vector<16x128xf32>
    %12 = arith.subf %4, %11 : vector<16x128xf32>
    %13 = arith.mulf %12, %12 : vector<16x128xf32>
    %cst_10 = arith.constant dense<0.000000e+00> : vector<16xf32>
    %14 = vector.multi_reduction <add>, %13, %cst_10 [1] : vector<16x128xf32> to vector<16xf32>
    %15 = vector.shape_cast %14 : vector<16xf32> to vector<16x1xf32>
    %cst_11 = arith.constant 1.280000e+02 : f32
    %16 = vector.broadcast %cst_11 : f32 to vector<16x1xf32>
    %17 = arith.divf %15, %16 : vector<16x1xf32>
    %18 = vector.broadcast %10 : vector<16x1xf32> to vector<16x128xf32>
    %19 = arith.subf %4, %18 : vector<16x128xf32>
    %cst_12 = arith.constant 9.99999996E-13 : f32
    %20 = vector.broadcast %cst_12 : f32 to vector<16x1xf32>
    %21 = arith.addf %17, %20 : vector<16x1xf32>
    %22 = math.rsqrt %21 : vector<16x1xf32>
    %23 = vector.broadcast %22 : vector<16x1xf32> to vector<16x128xf32>
    %24 = arith.mulf %19, %23 : vector<16x128xf32>
    %25 = vector.broadcast %5 : vector<1x128xf32> to vector<16x128xf32>
    %26 = arith.mulf %24, %25 : vector<16x128xf32>
    %27 = vector.broadcast %6 : vector<1x128xf32> to vector<16x128xf32>
    %28 = arith.addf %26, %27 : vector<16x128xf32>
    %c0_13 = arith.constant 0 : index
    %c0_14 = arith.constant 0 : index
    %29 = vector.load %arg6[%c0_13, %c0_14] : memref<16x128xf32, #tpu.memory_space<vmem>>, vector<16x128xf32>
    tpu.vector_store %arg6[%c0_13, %c0_14], %28 {strides = array<i32>} : memref<16x128xf32, #tpu.memory_space<vmem>>, vector<16x128xf32>,
    return
  }
  func.func @transform_0(%arg0: i32) -> (i32, i32) {
    %c0_i32 = arith.constant 0 : i32
    %c0_i32_0 = arith.constant 0 : i32
    return %arg0, %c0_i32 : i32, i32
  }
  func.func @transform_1(%arg0: i32) -> (i32, i32) {
    %c0_i32 = arith.constant 0 : i32
    %c0_i32_0 = arith.constant 0 : i32
    return %arg0, %c0_i32 : i32, i32
  }
  func.func @transform_2(%arg0: i32) -> (i32, i32) {
    %c0_i32 = arith.constant 0 : i32
    %c0_i32_0 = arith.constant 0 : i32
    return %arg0, %c0_i32 : i32, i32
  }
  func.func @transform_3(%arg0: i32) -> (i32, i32) {
    %c0_i32 = arith.constant 0 : i32
    %c0_i32_0 = arith.constant 0 : i32
    %c0_i32_1 = arith.constant 0 : i32
    return %c0_i32, %c0_i32_0 : i32, i32
  }
  func.func @transform_4(%arg0: i32) -> (i32, i32) {
    %c0_i32 = arith.constant 0 : i32
    %c0_i32_0 = arith.constant 0 : i32
    %c0_i32_1 = arith.constant 0 : i32
    return %c0_i32, %c0_i32_0 : i32, i32
  }
  func.func @transform_5(%arg0: i32) -> (i32, i32) {
    %c0_i32 = arith.constant 0 : i32
    %c0_i32_0 = arith.constant 0 : i32
    return %arg0, %c0_i32 : i32, i32
  }
}

</mosaic_0001>

<llo_original>
// kernel: tpu_custom_call.1
$region0: #{tpu_custom_call.1}
  #allocation0 [shape = 'u32[]', space=smem, size = 0x4, offset = 0x4, fixed_abs, tag = 'smem constant byte address 0x4 - core index']
  #allocation1 [shape = 'u32[144,128]{1,0:T(1,128)}', space=vmem, size = 0x12000, scoped, tag = 'internal scratch']
  %s0 = inlined_call_operand.hbm [shape: f32[32,128], index: 0, kind: input, shape index: {}]
  %s1 = inlined_call_operand.hbm [shape: f32[32,128], index: 1, kind: input, shape index: {}]
  %s2 = inlined_call_operand.hbm [shape: f32[32,128], index: 2, kind: input, shape index: {}]
  %s3 = inlined_call_operand.vmem [shape: f32[1,128], index: 3, kind: input, shape index: {}]
  %s4 = inlined_call_operand.vmem [shape: f32[1,128], index: 4, kind: input, shape index: {}]
  %s5 = inlined_call_operand.hbm [shape: f32[32,128], index: 5, kind: output, shape index: {}]
  %s6 = sld [smem:[#allocation0]]
  $region65: #{tpu_custom_call.1} parent=0
    _
  %s8 = ssub.s32 1, %s6
  %s9 = scalar_select 0, %s8, %s6
  $region1: #{tpu_custom_call.1} parent=0
    #allocation2 [shape = 'u8[16384]{0}', space=vmem, size = 0x4000, scoped, tag = 'input window, operand 0']
    #allocation3 [shape = 's32[2]{0}', space=sflag, size = 0x8, scoped, tag = 'scoped memory for tpu_custom_call.1']
    #allocation4 [shape = 's32[2]{0}', space=sflag, size = 0x8, scoped, tag = 'scoped memory for tpu_custom_call.1']
    #allocation5 [shape = 'u8[16384]{0}', space=vmem, size = 0x4000, scoped, tag = 'input window, operand 1']
    #allocation6 [shape = 's32[2]{0}', space=sflag, size = 0x8, scoped, tag = 'scoped memory for tpu_custom_call.1']
    #allocation7 [shape = 'u8[16384]{0}', space=vmem, size = 0x4000, scoped, tag = 'input window, operand 2']
    #allocation8 [shape = 'u8[16384]{0}', space=vmem, size = 0x4000, scoped, tag = 'output window, operand 0']
    %10 = vsyncpa [#allocation3], 0
    %s11 = scalar_lea.sflag [#allocation3], 1
    %12 = vsyncpa %s11, 0
    %13 = vsyncpa [#allocation6], 0
    %s14 = scalar_lea.sflag [#allocation6], 1
    %15 = vsyncpa %s14, 0
    %16 = vsyncpa [#allocation4], 0
    %s17 = scalar_lea.sflag [#allocation4], 1
    %18 = vsyncpa %s17, 0
    loop: start=0, step=1, limit=4
    $region2: #{tpu_custom_call.1} parent=1 // loop_pre_header
      _
    $region3: #{tpu_custom_call.1} parent=1 // loop_header
      %s20 = sphi 0, %s24
      %p21 = scmp.ge.s32.totalorder %s20, 4
      %s30 = sphi 0, %s32
      %s33 = sphi 0, %s30
      %s34 = sphi 0, %s33
      %s50 = sphi 0, %s34
      %s56 = sphi 0, %s58
      %s59 = sphi 0, %s56
      %s60 = sphi 0, %s59
      %s76 = sphi 0, %s60
      %s82 = sphi 0, %s84
      %s85 = sphi 0, %s82
      %s86 = sphi 0, %s85
      %s102 = sphi 0, %s86
      %s106 = sphi 0, %s106
      %s108 = sphi 0, %s106
      %s109 = sphi 0, %s108
      %s123 = sphi 0, %s109
      %s127 = sphi 0, %s127
      %s129 = sphi 0, %s127
      %s130 = sphi 0, %s129
      %s144 = sphi 0, %s130
      %s150 = sphi 0, %s152
      %s153 = sphi 0, %s150
      %s154 = sphi 0, %s153
      %s170 = sphi 0, %s154
    $region4: #{tpu_custom_call.1} parent=1 // loop_header_branch
      %23 = sbr.rel (%p21) target = $region8
    $region5: #{tpu_custom_call.1} parent=1 // loop_body
      %s25 = ssub.s32 %s20, 1
      %s26 = ssub.s32 %s20, 2
      %s27 = sadd.s32 %s20, 1
      %s28 = ssub.s32 %s20, %s27
      %p29 = scmp.eq.s32.totalorder %s28, 0
      %s31 = sadd.s32 %s30, 1
      %s32 = scalar_select %p29, %s30, %s31
      %p35 = pneg %p29
      %p36 = scmp.eq.s32.totalorder %s20, 1
      %p37 = por %p35, %p36
      %p38 = scmp.ne.s32.totalorder %s30, %s33
      %p39 = scmp.eq.s32.totalorder %s20, 0
      %p40 = por %p38, %p39
      %p41 = scmp.ne.s32.totalorder %s30, %s33
      %p42 = scmp.eq.s32.totalorder %s25, 1
      %p43 = por %p41, %p42
      %p44 = scmp.ne.s32.totalorder %s33, %s34
      %p45 = scmp.eq.s32.totalorder %s25, 0
      %p46 = por %p44, %p45
      %p47 = scmp.ne.s32.totalorder %s33, %s34
      %p48 = scmp.eq.s32.totalorder %s26, 1
      %p49 = por %p47, %p48
      %p51 = scmp.ne.s32.totalorder %s34, %s50
      %p52 = scmp.eq.s32.totalorder %s26, 0
      %p53 = por %p51, %p52
      %s54 = ssub.s32 %s20, %s27
      %p55 = scmp.eq.s32.totalorder %s54, 0
      %s57 = sadd.s32 %s56, 1
      %s58 = scalar_select %p55, %s56, %s57
      %p61 = pneg %p55
      %p62 = scmp.eq.s32.totalorder %s20, 1
      %p63 = por %p61, %p62
      %p64 = scmp.ne.s32.totalorder %s56, %s59
      %p65 = scmp.eq.s32.totalorder %s20, 0
      %p66 = por %p64, %p65
      %p67 = scmp.ne.s32.totalorder %s56, %s59
      %p68 = scmp.eq.s32.totalorder %s25, 1
      %p69 = por %p67, %p68
      %p70 = scmp.ne.s32.totalorder %s59, %s60
      %p71 = scmp.eq.s32.totalorder %s25, 0
      %p72 = por %p70, %p71
      %p73 = scmp.ne.s32.totalorder %s59, %s60
      %p74 = scmp.eq.s32.totalorder %s26, 1
      %p75 = por %p73, %p74
      %p77 = scmp.ne.s32.totalorder %s60, %s76
      %p78 = scmp.eq.s32.totalorder %s26, 0
      %p79 = por %p77, %p78
      %s80 = ssub.s32 %s20, %s27
      %p81 = scmp.eq.s32.totalorder %s80, 0
      %s83 = sadd.s32 %s82, 1
      %s84 = scalar_select %p81, %s82, %s83
      %p87 = pneg %p81
      %p88 = scmp.eq.s32.totalorder %s20, 1
      %p89 = por %p87, %p88
      %p90 = scmp.ne.s32.totalorder %s82, %s85
      %p91 = scmp.eq.s32.totalorder %s20, 0
      %p92 = por %p90, %p91
      %p93 = scmp.ne.s32.totalorder %s82, %s85
      %p94 = scmp.eq.s32.totalorder %s25, 1
      %p95 = por %p93, %p94
      %p96 = scmp.ne.s32.totalorder %s85, %s86
      %p97 = scmp.eq.s32.totalorder %s25, 0
      %p98 = por %p96, %p97
      %p99 = scmp.ne.s32.totalorder %s85, %s86
      %p100 = scmp.eq.s32.totalorder %s26, 1
      %p101 = por %p99, %p100
      %p103 = scmp.ne.s32.totalorder %s86, %s102
      %p104 = scmp.eq.s32.totalorder %s26, 0
      %p105 = por %p103, %p104
      %s107 = sadd.s32 %s106, 1
      %p110 = scmp.eq.s32.totalorder %s20, 1
      %p111 = scmp.ne.s32.totalorder %s106, %s108
      %p112 = scmp.eq.s32.totalorder %s20, 0
      %p113 = por %p111, %p112
      %p114 = scmp.ne.s32.totalorder %s106, %s108
      %p115 = scmp.eq.s32.totalorder %s25, 1
      %p116 = por %p114, %p115
      %p117 = scmp.ne.s32.totalorder %s108, %s109
      %p118 = scmp.eq.s32.totalorder %s25, 0
      %p119 = por %p117, %p118
      %p120 = scmp.ne.s32.totalorder %s108, %s109
      %p121 = scmp.eq.s32.totalorder %s26, 1
      %p122 = por %p120, %p121
      %p124 = scmp.ne.s32.totalorder %s109, %s123
      %p125 = scmp.eq.s32.totalorder %s26, 0
      %p126 = por %p124, %p125
      %s128 = sadd.s32 %s127, 1
      %p131 = scmp.eq.s32.totalorder %s20, 1
      %p132 = scmp.ne.s32.totalorder %s127, %s129
      %p133 = scmp.eq.s32.totalorder %s20, 0
      %p134 = por %p132, %p133
      %p135 = scmp.ne.s32.totalorder %s127, %s129
      %p136 = scmp.eq.s32.totalorder %s25, 1
      %p137 = por %p135, %p136
      %p138 = scmp.ne.s32.totalorder %s129, %s130
      %p139 = scmp.eq.s32.totalorder %s25, 0
      %p140 = por %p138, %p139
      %p141 = scmp.ne.s32.totalorder %s129, %s130
      %p142 = scmp.eq.s32.totalorder %s26, 1
      %p143 = por %p141, %p142
      %p145 = scmp.ne.s32.totalorder %s130, %s144
      %p146 = scmp.eq.s32.totalorder %s26, 0
      %p147 = por %p145, %p146
      %s148 = ssub.s32 %s20, %s27
      %p149 = scmp.eq.s32.totalorder %s148, 0
      %s151 = sadd.s32 %s150, 1
      %s152 = scalar_select %p149, %s150, %s151
      %p155 = pneg %p149
      %p156 = scmp.eq.s32.totalorder %s20, 1
      %p157 = por %p155, %p156
      %p158 = scmp.ne.s32.totalorder %s150, %s153
      %p159 = scmp.eq.s32.totalorder %s20, 0
      %p160 = por %p158, %p159
      %p161 = scmp.ne.s32.totalorder %s150, %s153
      %p162 = scmp.eq.s32.totalorder %s25, 1
      %p163 = por %p161, %p162
      %p164 = scmp.ne.s32.totalorder %s153, %s154
      %p165 = scmp.eq.s32.totalorder %s25, 0
      %p166 = por %p164, %p165
      %p167 = scmp.ne.s32.totalorder %s153, %s154
      %p168 = scmp.eq.s32.totalorder %s26, 1
      %p169 = por %p167, %p168
      %p171 = scmp.ne.s32.totalorder %s154, %s170
      %p172 = scmp.eq.s32.totalorder %s26, 0
      %p173 = por %p171, %p172
      %p174 = scmp.le.s32.totalorder 1, %s20
      %p175 = scmp.lt.s32.totalorder %s20, 3
      %p176 = pnand %p174, %p175
      %p177 = pneg %p176
      // Predicated region
      $region9: #{tpu_custom_call.1} parent=5 // pred_check
        _
      $region10: #{tpu_custom_call.1} parent=5 // pred_check_branch
        %179 = sbr.rel (%p176) target = $region12
      $region11: #{tpu_custom_call.1} parent=5 // pred_region
        %s180 = ssub.s32 %s20, 1
        // Predicated region
        $region13: #{tpu_custom_call.1} parent=11 // pred_check
          %p181 = pneg %p119
        $region14: #{tpu_custom_call.1} parent=11 // pred_check_branch
          %183 = sbr.rel (%p181) target = $region16
        $region15: #{tpu_custom_call.1} parent=11 // pred_region
          _
        $region16: #{tpu_custom_call.1} parent=11 // pred_fallthru
          _
        // Predicated region
        $region17: #{tpu_custom_call.1} parent=11 // pred_check
          %p184 = pneg %p140
        $region18: #{tpu_custom_call.1} parent=11 // pred_check_branch
          %186 = sbr.rel (%p184) target = $region20
        $region19: #{tpu_custom_call.1} parent=11 // pred_region
          _
        $region20: #{tpu_custom_call.1} parent=11 // pred_fallthru
          _
      $region12: #{tpu_custom_call.1} parent=5 // pred_fallthru
        _
      %p187 = scmp.lt.s32.totalorder %s20, 2
      // Predicated region
      $region21: #{tpu_custom_call.1} parent=5 // pred_check
        %p188 = pneg %p187
      $region22: #{tpu_custom_call.1} parent=5 // pred_check_branch
        %190 = sbr.rel (%p188) target = $region24
      $region23: #{tpu_custom_call.1} parent=5 // pred_region
        // Predicated region
        $region25: #{tpu_custom_call.1} parent=23 // pred_check
          %p191 = pneg %p40
        $region26: #{tpu_custom_call.1} parent=23 // pred_check_branch
          %193 = sbr.rel (%p191) target = $region28
        $region27: #{tpu_custom_call.1} parent=23 // pred_region
          %s194 = sand.u32 %s30, 1
          %s195 = scalar_lea.sflag [#allocation3], %s194
          %s196 = sand.u32 %s30, 1
          %s197 = smul.addr %s196, 16
          %s198 = scalar_lea.vmem [#allocation2], %s197
          %s199 = smul.u32 2, %s20
          %s201 = ssub.s32 256, 256
          %202 = vsyncadd %s195, %s201
          %s203 = smul.addr %s199, 128
          %s204 = scalar_lea.hbm %s0, %s203
          %s205 = sshll.u32 %s198, 4
          %s206 = int_to_ptr.vmem [resolvable:$true] %s205
          %211 = dma.hbm_to_vmem [thread:$0]  %s204, 256, %s206, %s195, 128, 128, 8
        $region28: #{tpu_custom_call.1} parent=23 // pred_fallthru
          _
        // Predicated region
        $region29: #{tpu_custom_call.1} parent=23 // pred_check
          %p212 = pneg %p66
        $region30: #{tpu_custom_call.1} parent=23 // pred_check_branch
          %214 = sbr.rel (%p212) target = $region32
        $region31: #{tpu_custom_call.1} parent=23 // pred_region
          %s215 = sand.u32 %s20, 1
          %s216 = scalar_lea.sflag [#allocation6], %s215
          %s217 = sand.u32 %s56, 1
          %s218 = smul.addr %s217, 16
          %s219 = scalar_lea.vmem [#allocation5], %s218
          %s220 = smul.u32 2, %s20
          %s222 = ssub.s32 256, 256
          %223 = vsyncadd %s216, %s222
          %s224 = smul.addr %s220, 128
          %s225 = scalar_lea.hbm %s1, %s224
          %s226 = sshll.u32 %s219, 4
          %s227 = int_to_ptr.vmem [resolvable:$true] %s226
          %232 = dma.hbm_to_vmem [thread:$0]  %s225, 256, %s227, %s216, 128, 128, 8
        $region32: #{tpu_custom_call.1} parent=23 // pred_fallthru
          _
        // Predicated region
        $region33: #{tpu_custom_call.1} parent=23 // pred_check
          %p233 = pneg %p92
        $region34: #{tpu_custom_call.1} parent=23 // pred_check_branch
          %235 = sbr.rel (%p233) target = $region36
        $region35: #{tpu_custom_call.1} parent=23 // pred_region
          %s236 = sand.u32 %s20, 1
          %s237 = scalar_lea.sflag [#allocation6], %s236
          %s238 = sand.u32 %s82, 1
          %s239 = smul.addr %s238, 16
          %s240 = scalar_lea.vmem [#allocation7], %s239
          %s241 = smul.u32 2, %s20
          %s243 = ssub.s32 256, 256
          %244 = vsyncadd %s237, %s243
          %s245 = smul.addr %s241, 128
          %s246 = scalar_lea.hbm %s2, %s245
          %s247 = sshll.u32 %s240, 4
          %s248 = int_to_ptr.vmem [resolvable:$true] %s247
          %253 = dma.hbm_to_vmem [thread:$0]  %s246, 256, %s248, %s237, 128, 128, 8
        $region36: #{tpu_custom_call.1} parent=23 // pred_fallthru
          _
      $region24: #{tpu_custom_call.1} parent=5 // pred_fallthru
        _
      %p254 = scmp.le.s32.totalorder 1, %s20
      %p255 = scmp.lt.s32.totalorder %s20, 3
      %p256 = pnand %p254, %p255
      %p257 = pneg %p256
      // Predicated region
      $region37: #{tpu_custom_call.1} parent=5 // pred_check
        _
      $region38: #{tpu_custom_call.1} parent=5 // pred_check_branch
        %259 = sbr.rel (%p256) target = $region40
      $region39: #{tpu_custom_call.1} parent=5 // pred_region
        %s260 = ssub.s32 %s20, 1
        %s261 = sand.u32 %s33, 1
        %s262 = scalar_lea.sflag [#allocation3], %s261
        %s263 = sand.u32 %s33, 1
        %s264 = smul.addr %s263, 16
        %s265 = scalar_lea.vmem [#allocation2], %s264
        // Predicated region
        $region41: #{tpu_custom_call.1} parent=39 // pred_check
          %p266 = pneg %p46
        $region42: #{tpu_custom_call.1} parent=39 // pred_check_branch
          %268 = sbr.rel (%p266) target = $region44
        $region43: #{tpu_custom_call.1} parent=39 // pred_region
          %269 = dma.done %s262, 256
        $region44: #{tpu_custom_call.1} parent=39 // pred_fallthru
          _
        %s270 = sand.u32 %s25, 1
        %s271 = scalar_lea.sflag [#allocation6], %s270
        %s272 = sand.u32 %s59, 1
        %s273 = smul.addr %s272, 16
        %s274 = scalar_lea.vmem [#allocation5], %s273
        // Predicated region
        $region45: #{tpu_custom_call.1} parent=39 // pred_check
          %p275 = pneg %p72
        $region46: #{tpu_custom_call.1} parent=39 // pred_check_branch
          %277 = sbr.rel (%p275) target = $region48
        $region47: #{tpu_custom_call.1} parent=39 // pred_region
          %278 = dma.done %s271, 256
        $region48: #{tpu_custom_call.1} parent=39 // pred_fallthru
          _
        %s279 = sand.u32 %s25, 1
        %s280 = scalar_lea.sflag [#allocation6], %s279
        %s281 = sand.u32 %s85, 1
        %s282 = smul.addr %s281, 16
        %s283 = scalar_lea.vmem [#allocation7], %s282
        // Predicated region
        $region49: #{tpu_custom_call.1} parent=39 // pred_check
          %p284 = pneg %p98
        $region50: #{tpu_custom_call.1} parent=39 // pred_check_branch
          %286 = sbr.rel (%p284) target = $region52
        $region51: #{tpu_custom_call.1} parent=39 // pred_region
          %287 = dma.done %s280, 256
        $region52: #{tpu_custom_call.1} parent=39 // pred_fallthru
          _
        %s288 = sand.u32 %s33, 1
        %s289 = scalar_lea.sflag [#allocation3], %s288
        %s290 = sand.u32 %s33, 1
        %s291 = smul.addr %s290, 16
        %s292 = scalar_lea.vmem [#allocation2], %s291
        %p293 = pneg %p46
        %p294 = pneg %p43
        %s295 = sand.u32 %s25, 1
        %s296 = scalar_lea.sflag [#allocation6], %s295
        %s297 = sand.u32 %s59, 1
        %s298 = smul.addr %s297, 16
        %s299 = scalar_lea.vmem [#allocation5], %s298
        %p300 = pneg %p72
        %p301 = pneg %p69
        %s302 = sand.u32 %s25, 1
        %s303 = scalar_lea.sflag [#allocation6], %s302
        %s304 = sand.u32 %s85, 1
        %s305 = smul.addr %s304, 16
        %s306 = scalar_lea.vmem [#allocation7], %s305
        %p307 = pneg %p98
        %p308 = pneg %p95
        %p309 = pneg %p119
        %p310 = pneg %p116
        %p311 = pneg %p140
        %p312 = pneg %p137
        %p313 = pneg %p166
        %p314 = pneg %p163
        %s315 = sand.u32 %s153, 1
        %s316 = scalar_lea.sflag [#allocation4], %s315
        %s317 = sand.u32 %s153, 1
        %s318 = smul.addr %s317, 16
        %s319 = scalar_lea.vmem [#allocation8], %s318
        %s320 = smul.u32 2, %s25
        %s321 = smul.u32 2, %s25
        %s322 = smul.u32 2, %s25
        %s323 = smul.u32 2, %s25
        %v324 = vld [vmem:[%s265] sm:$0xff]
        %v325 = vld [vmem:[%s265 + $0x8] sm:$0xff]
        %v326 = vld [vmem:[%s274] sm:$0xff]
        %v327 = vld [vmem:[%s274 + $0x8] sm:$0xff]
        %v328 = vadd.f32 %v324, %v326
        %v329 = vadd.f32 %v325, %v327
        %v330 = vld [vmem:[%s283] sm:$0xff]
        %v331 = vld [vmem:[%s283 + $0x8] sm:$0xff]
        %v332 = vadd.f32 %v328, %v330
        %v333 = vadd.f32 %v329, %v331
        %v334 = vld [vmem:[%s3] sm:$0x1]
        %v335 = vld [vmem:[%s4] sm:$0x1]
        %336 = vadd.xlane.f32.xlu0 %v332
        %v337 = vpop.xlane.xlu0 %336
        %338 = vadd.xlane.f32.xlu0 %v333
        %v339 = vpop.xlane.xlu0 %338
        %v340 = vrcp.pop 128.0
        %v341 = vmul.f32 %v337, %v340
        %v342 = vmul.f32 %v339, %v340
        %v343 = vsub.f32 %v332, %v341
        %v344 = vsub.f32 %v333, %v342
        %v345 = vmul.f32 %v343, %v343
        %v346 = vmul.f32 %v344, %v344
        %347 = vadd.xlane.f32.xlu0 %v345
        %v348 = vpop.xlane.xlu0 %347
        %349 = vadd.xlane.f32.xlu0 %v346
        %v350 = vpop.xlane.xlu0 %349
        %v351 = vmul.f32 %v348, %v340
        %v352 = vmul.f32 %v350, %v340
        %v353 = vadd.f32 %v351, 1e-12
        %v354 = vadd.f32 %v352, 1e-12
        %v355 = vrsqrt.pop %v353
        %v356 = vrsqrt.pop %v354
        %v357 = vmul.f32 %v343, %v355
        %v358 = vmul.f32 %v344, %v356
        %v360 = vlaneseq
        %v361 = vshrl.u32 %v360, 7
        %v362 = vsub.s32 0, %v361
        %v363 = vrot.slane %v334, %v362
        %v365 = vmul.f32 %v357, %v363
        %v366 = vmul.f32 %v358, %v363
        %v368 = vlaneseq
        %v369 = vshrl.u32 %v368, 7
        %v370 = vsub.s32 0, %v369
        %v371 = vrot.slane %v335, %v370
        %v373 = vadd.f32 %v365, %v371
        %v374 = vadd.f32 %v366, %v371
        %375 = vst [vmem:[%s319] sm:$0xff] %v373
        %376 = vst [vmem:[%s319 + $0x8] sm:$0xff] %v374
        %s377 = sand.u32 %s153, 1
        %s378 = scalar_lea.sflag [#allocation4], %s377
        %s379 = sand.u32 %s153, 1
        %s380 = smul.addr %s379, 16
        %s381 = scalar_lea.vmem [#allocation8], %s380
        // Predicated region
        $region53: #{tpu_custom_call.1} parent=39 // pred_check
          %p382 = pneg %p163
        $region54: #{tpu_custom_call.1} parent=39 // pred_check_branch
          %384 = sbr.rel (%p382) target = $region56
        $region55: #{tpu_custom_call.1} parent=39 // pred_region
          %s385 = smul.u32 2, %s25
          %s387 = ssub.s32 256, 256
          %388 = vsyncadd %s378, %s387
          %s389 = smul.addr %s385, 128
          %s390 = scalar_lea.hbm %s5, %s389
          %s391 = sshll.u32 %s381, 4
          %s392 = int_to_ptr.vmem [resolvable:$true] %s391
          %397 = dma.vmem_to_hbm [thread:$0]  %s392, 256, %s390, %s378, 128, 128, 8
        $region56: #{tpu_custom_call.1} parent=39 // pred_fallthru
          _
      $region40: #{tpu_custom_call.1} parent=5 // pred_fallthru
        _
      %p398 = scmp.le.s32.totalorder 2, %s20
      // Predicated region
      $region57: #{tpu_custom_call.1} parent=5 // pred_check
        %p399 = pneg %p398
      $region58: #{tpu_custom_call.1} parent=5 // pred_check_branch
        %401 = sbr.rel (%p399) target = $region60
      $region59: #{tpu_custom_call.1} parent=5 // pred_region
        %s402 = ssub.s32 %s20, 2
        // Predicated region
        $region61: #{tpu_custom_call.1} parent=59 // pred_check
          %p403 = pneg %p169
        $region62: #{tpu_custom_call.1} parent=59 // pred_check_branch
          %405 = sbr.rel (%p403) target = $region64
        $region63: #{tpu_custom_call.1} parent=59 // pred_region
          %s406 = sand.u32 %s154, 1
          %s407 = scalar_lea.sflag [#allocation4], %s406
          %s408 = sand.u32 %s154, 1
          %s409 = smul.addr %s408, 16
          %s410 = scalar_lea.vmem [#allocation8], %s409
          %411 = dma.done %s407, 256
        $region64: #{tpu_custom_call.1} parent=59 // pred_fallthru
          _
      $region60: #{tpu_custom_call.1} parent=5 // pred_fallthru
        _
    $region6: #{tpu_custom_call.1} parent=1 // loop_footer
      %s24 = sadd.s32 1, %s20
    $region7: #{tpu_custom_call.1} parent=1 // loop_footer_branch
      %19 = sbr.rel target = $region3
    $region8: #{tpu_custom_call.1} parent=1 // loop_exit
      _
    %412 = vsyncpa [#allocation3], 1
    %s413 = scalar_lea.sflag [#allocation3], 1
    %414 = vsyncpa %s413, 1
    %415 = vsyncpa [#allocation6], 1
    %s416 = scalar_lea.sflag [#allocation6], 1
    %417 = vsyncpa %s416, 1
    %418 = vsyncpa [#allocation4], 1
    %s419 = scalar_lea.sflag [#allocation4], 1
    %420 = vsyncpa %s419, 1

</llo_original>
